<compile_context>
chip_gen: v6e
topology: v6e:2x2x1
jax: 0.10.0
libtpu: 0.0.40
codegen_flags: <defaults>
</compile_context>

<pallas_src>
import functools

import jax
import jax.numpy as jnp
from jax.experimental import pallas as pl
from jax.experimental.pallas import tpu as pltpu


# Target footprint of the double-buffered pipeline (x + y + out blocks, two
# buffers each).  24 MiB fits comfortably under v7x's 64 MiB physical VMEM and
# the 32 MiB scoped limit requested below, on every generation.
_VMEM_PIPELINE_BUDGET_BYTES = 24 * 1024 * 1024
# Explicit scoped-VMEM limit: above the 16 MiB v5e default, within every chip's
# physical VMEM (128 MiB v5e/v6e, 64 MiB v7x).
_VMEM_LIMIT_BYTES = 32 * 1024 * 1024
# Only split the batch for megacore once each half is still a large tile
# (tiles >= ~256-512 rows already sit near HBM roofline).
_MEGACORE_MIN_ROWS_PER_TILE = 256


def _pick_tile_b(batch: int, row_bytes_double_buffered: int) -> int:
    """Largest sublane-aligned batch tile that fits the VMEM pipeline budget,
    capped so large batches get >= 2 grid steps (v7x megacore), preferring a
    divisor of `batch` so the last block is not masked."""
    t = int(_VMEM_PIPELINE_BUDGET_BYTES // max(1, row_bytes_double_buffered))
    if batch >= 2 * _MEGACORE_MIN_ROWS_PER_TILE:
        t = min(t, (batch + 1) // 2)
    if t >= batch:
        return batch  # single full-extent block: always layout-legal
    t = max(8, (t // 8) * 8)  # non-full blocks must be sublane (8) aligned
    # Cheap search for a divisor of batch among nearby multiples of 8.
    for cand in range(t, max(7, t - 256), -8):
        if batch % cand == 0:
            return cand
    return t


def _fused_concat_identity_kernel(x_ref, y_ref, o_ref, *, dx: int, dy: int):
    """Fused concat([x, y], axis=-1) followed by the empty nn.Sequential()
    (identity).  Dtype promotion happens here on the VPU (free slot in a
    mem-bound kernel) instead of as a separate XLA cast pass over HBM."""
    if dx > 0:
        o_ref[:, :dx] = x_ref[...].astype(o_ref.dtype)
    if dy > 0:
        o_ref[:, dx:] = y_ref[...].astype(o_ref.dtype)


def generator_forward(x: jax.Array, y: jax.Array) -> jax.Array:
    """Forward pass of the (stub) Generator: identity(concat([x, y], -1))."""
    assert x.ndim == 2 and y.ndim == 2 and x.shape[0] == y.shape[0]
    B, Dx = x.shape
    _, Dy = y.shape
    D = Dx + Dy

    # dtype the concat itself would produce; the empty Sequential does not cast.
    out_dtype = jnp.result_type(x.dtype, y.dtype)

    # Degenerate shapes: avoid 0-width blocks / stores in Mosaic.
    if B == 0 or D == 0:
        return jnp.zeros((B, D), out_dtype)
    if Dx == 0:
        return y.astype(out_dtype)
    if Dy == 0:
        return x.astype(out_dtype)

    x_isz = jnp.dtype(x.dtype).itemsize
    y_isz = jnp.dtype(y.dtype).itemsize
    o_isz = jnp.dtype(out_dtype).itemsize

    # Per-batch-row bytes of the double-buffered pipeline (x + y + out blocks).
    row_bytes_db = 2 * (Dx * x_isz + Dy * y_isz + D * o_isz)
    tile_b = _pick_tile_b(B, row_bytes_db)

    cost = pl.CostEstimate(
        flops=0,
        transcendentals=0,
        bytes_accessed=B * (Dx * x_isz + Dy * y_isz + D * o_isz),
    )

    return pl.pallas_call(
        functools.partial(_fused_concat_identity_kernel, dx=Dx, dy=Dy),
        out_shape=jax.ShapeDtypeStruct((B, D), out_dtype),
        grid=(pl.cdiv(B, tile_b),),
        in_specs=[
            pl.BlockSpec((tile_b, Dx), lambda i: (i, 0)),
            pl.BlockSpec((tile_b, Dy), lambda i: (i, 0)),
        ],
        out_specs=pl.BlockSpec((tile_b, D), lambda i: (i, 0)),
        compiler_params=pltpu.CompilerParams(
            # Batch tiles are independent -> on v7x both TensorCores each take
            # part of the grid; harmless no-op on single-TC v5e/v6e.
            dimension_semantics=("parallel",),
            vmem_limit_bytes=_VMEM_LIMIT_BYTES,
        ),
        cost_estimate=cost,
    )(x, y)


if __name__ == "__main__":
    key = jax.random.PRNGKey(0)
    kx, ky, kx2, ky2 = jax.random.split(key, 4)

    # Case 1: small stub-sized inputs (batch=2, latent dim=16, condition dim=8),
    # single full-extent block.
    x = jax.random.normal(kx, (2, 16), dtype=jnp.float32)
    y = jax.random.normal(ky, (2, 8), dtype=jnp.float32)
    out = jax.block_until_ready(generator_forward(x, y))
    ref = jnp.concatenate([x, y], axis=-1)
    assert out.shape == (2, 24)
    assert out.dtype == ref.dtype
    assert jnp.array_equal(out, ref), "Pallas fused-concat identity kernel mismatch"

    # Case 2: exercises the tiled multi-step grid and the in-kernel dtype
    # promotion path (bf16 -> f32 cast is exact, so equality still holds).
    x2 = jax.random.normal(kx2, (1024, 384), dtype=jnp.float32)
    y2 = jax.random.normal(ky2, (1024, 128), dtype=jnp.bfloat16)
    out2 = jax.block_until_ready(generator_forward(x2, y2))
    ref2 = jnp.concatenate([x2, y2.astype(jnp.float32)], axis=-1)
    assert out2.shape == ref2.shape
    assert out2.dtype == ref2.dtype
    assert jnp.array_equal(out2, ref2), "Pallas fused-concat (tiled/cast) mismatch"

    print("KERNEL_OK")
</pallas_src>

<mosaic_0001>
module attributes {stable_mosaic.version = 11 : i64} {
  func.func @_fused_concat_identity_kernel(%arg0: i32, %arg1: memref<2x16xf32, #tpu.memory_space<vmem>>, %arg2: memref<2x8xf32, #tpu.memory_space<vmem>>, %arg3: memref<2x24xf32, #tpu.memory_space<vmem>>) attributes {dimension_semantics = [#tpu.dimension_semantics<parallel>], iteration_bounds = array<i64: 1>, scalar_prefetch = 0 : i64, scratch_operands = 0 : i64, tpu.core_type = #tpu.core_type<tc>, window_params = [{transform_indices = @transform_0, window_bounds = array<i64: 2, 16>}, {transform_indices = @transform_1, window_bounds = array<i64: 2, 8>}, {transform_indices = @transform_2, window_bounds = array<i64: 2, 24>}]} {
    %c0 = arith.constant 0 : index
    %c0_0 = arith.constant 0 : index
    %0 = vector.load %arg1[%c0, %c0_0] : memref<2x16xf32, #tpu.memory_space<vmem>>, vector<2x16xf32>
    %c0_1 = arith.constant 0 : index
    %c0_2 = arith.constant 0 : index
    %1 = vector.load %arg3[%c0_1, %c0_2] : memref<2x24xf32, #tpu.memory_space<vmem>>, vector<2x16xf32>
    tpu.vector_store %arg3[%c0_1, %c0_2], %0 {strides = array<i32>} : memref<2x24xf32, #tpu.memory_space<vmem>>, vector<2x16xf32>,
    %c0_3 = arith.constant 0 : index
    %c0_4 = arith.constant 0 : index
    %2 = vector.load %arg2[%c0_3, %c0_4] : memref<2x8xf32, #tpu.memory_space<vmem>>, vector<2x8xf32>
    %c0_5 = arith.constant 0 : index
    %c16 = arith.constant 16 : index
    %3 = vector.load %arg3[%c0_5, %c16] : memref<2x24xf32, #tpu.memory_space<vmem>>, vector<2x8xf32>
    tpu.vector_store %arg3[%c0_5, %c16], %2 {strides = array<i32>} : memref<2x24xf32, #tpu.memory_space<vmem>>, vector<2x8xf32>,
    return
  }
  func.func @transform_0(%arg0: i32) -> (i32, i32) {
    %c0_i32 = arith.constant 0 : i32
    %c0_i32_0 = arith.constant 0 : i32
    return %arg0, %c0_i32 : i32, i32
  }
  func.func @transform_1(%arg0: i32) -> (i32, i32) {
    %c0_i32 = arith.constant 0 : i32
    %c0_i32_0 = arith.constant 0 : i32
    return %arg0, %c0_i32 : i32, i32
  }
  func.func @transform_2(%arg0: i32) -> (i32, i32) {
    %c0_i32 = arith.constant 0 : i32
    %c0_i32_0 = arith.constant 0 : i32
    return %arg0, %c0_i32 : i32, i32
  }
}

</mosaic_0001>

<llo_original>
// kernel: tpu_custom_call.1
$region0: #{tpu_custom_call.1}
  #allocation0 [shape = 'u32[]', space=smem, size = 0x4, offset = 0x4, fixed_abs, tag = 'smem constant byte address 0x4 - core index']
  #allocation1 [shape = 'u32[144,128]{1,0:T(1,128)}', space=vmem, size = 0x12000, scoped, tag = 'internal scratch']
  %s0 = inlined_call_operand.hbm [shape: f32[2,16], index: 0, kind: input, shape index: {}]
  %s1 = inlined_call_operand.hbm [shape: f32[2,8], index: 1, kind: input, shape index: {}]
  %s2 = inlined_call_operand.hbm [shape: f32[2,24], index: 2, kind: output, shape index: {}]
  %s3 = sld [smem:[#allocation0]]
  $region26: #{tpu_custom_call.1} parent=0
    _
  %s5 = ssub.s32 1, %s3
  %s6 = scalar_select 0, %s5, %s3
  $region1: #{tpu_custom_call.1} parent=0
    #allocation2 [shape = 'u8[1024]{0}', space=vmem, size = 0x400, scoped, tag = 'input window, operand 0, single buffered']
    #allocation3 [shape = 's32[1]{0}', space=sflag, size = 0x4, scoped, tag = 'scoped memory for tpu_custom_call.1']
    #allocation4 [shape = 's32[1]{0}', space=sflag, size = 0x4, scoped, tag = 'scoped memory for tpu_custom_call.1']
    #allocation5 [shape = 'u8[1024]{0}', space=vmem, size = 0x400, scoped, tag = 'input window, operand 1, single buffered']
    #allocation6 [shape = 's32[1]{0}', space=sflag, size = 0x4, scoped, tag = 'scoped memory for tpu_custom_call.1']
    #allocation7 [shape = 'u8[1024]{0}', space=vmem, size = 0x400, scoped, tag = 'output window, operand 0, single buffered']
    %7 = vsyncpa [#allocation3], 0
    %8 = vsyncpa [#allocation6], 0
    %9 = vsyncpa [#allocation4], 0
    // Predicated region
    $region2: #{tpu_custom_call.1} parent=1 // pred_check
      _
    $region3: #{tpu_custom_call.1} parent=1 // pred_check_branch
      %11 = sbr.rel (0) target = $region5
    $region4: #{tpu_custom_call.1} parent=1 // pred_region
      %s13 = ssub.s32 32, 32
      %14 = vsyncadd [#allocation3], %s13
      %s16 = sshll.u32 [#allocation2], 4
      %s17 = int_to_ptr.vmem [resolvable:$true] %s16
      %19 = dma.hbm_to_vmem [thread:$0]  %s0, 32, %s17, [#allocation3]
    $region5: #{tpu_custom_call.1} parent=1 // pred_fallthru
      _
    // Predicated region
    $region6: #{tpu_custom_call.1} parent=1 // pred_check
      _
    $region7: #{tpu_custom_call.1} parent=1 // pred_check_branch
      %21 = sbr.rel (0) target = $region9
    $region8: #{tpu_custom_call.1} parent=1 // pred_region
      %s23 = ssub.s32 32, 32
      %24 = vsyncadd [#allocation6], %s23
      %s26 = sshll.u32 [#allocation5], 4
      %s27 = int_to_ptr.vmem [resolvable:$true] %s26
      %29 = dma.hbm_to_vmem [thread:$0]  %s1, 32, %s27, [#allocation6]
    $region9: #{tpu_custom_call.1} parent=1 // pred_fallthru
      _
    // Predicated region
    $region10: #{tpu_custom_call.1} parent=1 // pred_check
      _
    $region11: #{tpu_custom_call.1} parent=1 // pred_check_branch
      %31 = sbr.rel (0) target = $region13
    $region12: #{tpu_custom_call.1} parent=1 // pred_region
      %32 = dma.done [#allocation3], 32
    $region13: #{tpu_custom_call.1} parent=1 // pred_fallthru
      _
    // Predicated region
    $region14: #{tpu_custom_call.1} parent=1 // pred_check
      _
    $region15: #{tpu_custom_call.1} parent=1 // pred_check_branch
      %34 = sbr.rel (0) target = $region17
    $region16: #{tpu_custom_call.1} parent=1 // pred_region
      %35 = dma.done [#allocation6], 32
    $region17: #{tpu_custom_call.1} parent=1 // pred_fallthru
      _
    %v36 = vld [vmem:[#allocation2] sm:$0x3]
    %vm37 = vcmask 123904
    %38 = vst.msk [vmem:[#allocation7] sm:$0x3] %vm37, %v36
    %v39 = vld [vmem:[#allocation5] sm:$0x3]
    %41 = vrot.lane.b32.xlu0 %v39, 16
    %v42 = vpop.permute.xlu0 %41
    %vm44 = vcmask 189568
    %45 = vst.msk [vmem:[#allocation7] sm:$0x3] %vm44, %v42
    // Predicated region
    $region18: #{tpu_custom_call.1} parent=1 // pred_check
      _
    $region19: #{tpu_custom_call.1} parent=1 // pred_check_branch
      %47 = sbr.rel (0) target = $region21
    $region20: #{tpu_custom_call.1} parent=1 // pred_region
      %s49 = ssub.s32 32, 32
      %50 = vsyncadd [#allocation4], %s49
      %s52 = sshll.u32 [#allocation7], 4
      %s53 = int_to_ptr.vmem [resolvable:$true] %s52
      %55 = dma.vmem_to_hbm [thread:$0]  %s53, 32, %s2, [#allocation4]
    $region21: #{tpu_custom_call.1} parent=1 // pred_fallthru
      _
    // Predicated region
    $region22: #{tpu_custom_call.1} parent=1 // pred_check
      _
    $region23: #{tpu_custom_call.1} parent=1 // pred_check_branch
      %57 = sbr.rel (0) target = $region25
    $region24: #{tpu_custom_call.1} parent=1 // pred_region
      %58 = dma.done [#allocation4], 32
    $region25: #{tpu_custom_call.1} parent=1 // pred_fallthru
      _
    %59 = vsyncpa [#allocation3], 1
    %60 = vsyncpa [#allocation6], 1
    %61 = vsyncpa [#allocation4], 1

</llo_original>
